<compile_context>
chip_gen: v5e
topology: v5e:2x2
jax: 0.10.0
libtpu: 0.0.40
codegen_flags: <defaults>
</compile_context>

<pallas_src>
import functools

import jax
import jax.numpy as jnp
from jax.experimental import pallas as pl
from jax.experimental.pallas import tpu as pltpu


def _label_smoothing_ce_kernel(x_ref, t_ref, out_ref, *, n_total, eps):
    i = pl.program_id(0)

    x = x_ref[...]                                   # native dtype (bf16 stays bf16)
    tn, c = x.shape

    # Per-row max in the native dtype (exact); upcast only the shifted values
    # for exp (f32 subtraction of bf16-representable values is exact).
    m = jnp.max(x, axis=-1, keepdims=True)                       # (tn, 1) native
    m_f32 = m.astype(jnp.float32)
    shifted = x.astype(jnp.float32) - m_f32                      # (tn, C) f32 temp
    sumexp = jnp.sum(jnp.exp(shifted), axis=-1, keepdims=True)   # (tn, 1) f32
    lse = jnp.log(sumexp) + m_f32                                # (tn, 1) f32

    # One-hot select of the target logit in the native dtype (exact); both
    # class-axis sums go through the otherwise idle MXU, accumulating in f32.
    tgt = t_ref[...]                                             # (tn, 1) int32
    col = jax.lax.broadcasted_iota(jnp.int32, (tn, c), 1)
    picked = jnp.where(col == tgt, x, jnp.zeros((), dtype=x.dtype))
    ones_rhs = jnp.ones((c, 128), dtype=x.dtype)
    sum_logits = jnp.dot(x, ones_rhs,
                         preferred_element_type=jnp.float32)[:, :1]      # (tn,1)
    tgt_logit = jnp.dot(picked, ones_rhs,
                        preferred_element_type=jnp.float32)[:, :1]       # (tn,1)

    #  -sum_c logp = C*lse - sum_c logits ;  -logp[tgt] = lse - logits[tgt]
    smooth_row = jnp.float32(c) * lse - sum_logits
    nll_row = lse - tgt_logit

    # Mask padded rows of the last partial tile AFTER all per-row math so
    # garbage / NaN / Inf rows contribute exactly zero.
    row_idx = i * tn + jax.lax.broadcasted_iota(jnp.int32, (tn, 1), 0)
    valid = row_idx < n_total
    smooth_sum = jnp.sum(jnp.where(valid, smooth_row, jnp.float32(0.0)))
    nll_sum = jnp.sum(jnp.where(valid, nll_row, jnp.float32(0.0)))

    # eps-weighted per-tile partial (the 1/N for 'mean' is applied outside).
    partial = smooth_sum * jnp.float32(eps / c) + jnp.float32(1.0 - eps) * nll_sum

    # Single lane-dense output block per tile: partial at [0,0,0], zeros
    # elsewhere, so the epilogue is one contiguous jnp.sum over the whole array.
    sub = jax.lax.broadcasted_iota(jnp.int32, (1, 8, 128), 1)
    lane = jax.lax.broadcasted_iota(jnp.int32, (1, 8, 128), 2)
    out_ref[...] = jnp.where((sub == 0) & (lane == 0), partial, jnp.float32(0.0))


def _round_up(x, m):
    return ((x + m - 1) // m) * m


def _vmem_capacity_bytes():
    """Generation-aware VMEM capacity (128 MiB v5e/v6e, 64 MiB v7x)."""
    try:
        info = pltpu.get_tpu_info()
        cap = getattr(info, "vmem_capacity_bytes", None)
        if cap:
            return int(cap)
    except Exception:
        pass
    return 128 * 1024 * 1024


def _tile_and_vmem(n, c, itemsize, row_tile):
    """Pick row-tile size and a matching vmem_limit_bytes."""
    cap = _vmem_capacity_bytes()
    budget = cap // 2                       # ~64 MiB on v5e/v6e, ~32 MiB on v7x
    # Per-row live set: 2x double-buffered input tile + f32 shifted/exp temps
    # + int32 iota + native one-hot temp + two (tn,128) f32 MXU results.
    per_row = c * (3 * itemsize + 12) + 1024

    if row_tile is not None:
        tn = int(row_tile)
        if tn < n and tn % 8 != 0:
            raise ValueError("row_tile must be a multiple of 8 when smaller than N")
        tn = min(tn, n)
    else:
        tn_budget = max(8, (budget // max(per_row, 1)) // 8 * 8)
        tn_budget = min(tn_budget, 4096)
        # TODO(synk): class-axis chunking (streaming logsumexp over C) for
        # 32k-256k vocabularies where even tn=8 busts the VMEM budget.
        # Target ~8 grid steps for pipelining / dual-TC sharding when rows allow.
        tn_target = _round_up(pl.cdiv(n, 8), 8) if n >= 64 else 8
        tn = min(tn_budget, tn_target)
        if tn >= n:
            tn = n
        else:
            # Prefer an even number of tiles (v7x: both TensorCores busy).
            num_tiles = pl.cdiv(n, tn)
            if num_tiles > 1 and num_tiles % 2 == 1:
                tn_alt = _round_up(pl.cdiv(n, num_tiles + 1), 8)
                if 8 <= tn_alt < n:
                    tn = tn_alt

    est = tn * per_row + (4 << 20)
    vmem_limit = int(min(cap * 3 // 4, max(32 << 20, budget + (16 << 20), est)))
    return tn, vmem_limit


def label_smoothing_cross_entropy(output, target, eps=0.1, reduction="mean",
                                  row_tile=None):
    """Pallas TPU LabelSmoothingCrossEntropy.forward ('mean' / 'sum')."""
    assert reduction in ("mean", "sum")  # TODO(synk): 'none' reduction not wired up
    n, c = output.shape
    itemsize = jnp.dtype(output.dtype).itemsize

    tn, vmem_limit = _tile_and_vmem(n, c, itemsize, row_tile)
    num_tiles = pl.cdiv(n, tn)

    tgt2d = target.astype(jnp.int32).reshape(n, 1)
    kernel = functools.partial(_label_smoothing_ce_kernel, n_total=n, eps=float(eps))

    cost = pl.CostEstimate(
        flops=10 * n * c,
        transcendentals=n * c,
        bytes_accessed=n * c * itemsize + n * 4 + num_tiles * 8 * 128 * 4,
    )

    part = pl.pallas_call(
        kernel,
        out_shape=jax.ShapeDtypeStruct((num_tiles, 8, 128), jnp.float32),
        grid=(num_tiles,),
        in_specs=[
            pl.BlockSpec((tn, c), lambda i: (i, 0)),   # logits row tile, all classes
            pl.BlockSpec((tn, 1), lambda i: (i, 0)),   # matching target rows
        ],
        out_specs=pl.BlockSpec((1, 8, 128), lambda i: (i, 0, 0)),
        compiler_params=pltpu.CompilerParams(
            dimension_semantics=("parallel",),         # v7x: shard tiles across TCs
            vmem_limit_bytes=vmem_limit,
        ),
        cost_estimate=cost,
    )(output, tgt2d)

    total = jnp.sum(part)                              # contiguous reduce
    if reduction == "mean":
        total = total / jnp.float32(n)
    return total


def _reference(output, target, eps=0.1, reduction="mean"):
    logp = jax.nn.log_softmax(output.astype(jnp.float32), axis=-1)
    c = output.shape[-1]
    picked = jnp.take_along_axis(logp, target[:, None], axis=-1)[:, 0]
    if reduction == "sum":
        smooth = -jnp.sum(logp)
        nll = -jnp.sum(picked)
    else:
        smooth = jnp.mean(-jnp.sum(logp, axis=-1))
        nll = jnp.mean(-picked)
    return smooth * eps / c + (1.0 - eps) * nll


if __name__ == "__main__":
    key = jax.random.PRNGKey(0)
    k1, k2, k3, k4, k5, k6 = jax.random.split(key, 6)

    # Small classifier-head shape, f32, 'mean' and 'sum'.
    N, C = 8, 32
    logits = jax.random.normal(k1, (N, C), dtype=jnp.float32)
    target = jax.random.randint(k2, (N,), 0, C, dtype=jnp.int32)
    loss = jax.block_until_ready(
        label_smoothing_cross_entropy(logits, target, eps=0.1, reduction="mean"))
    ref = _reference(logits, target, eps=0.1, reduction="mean")
    assert jnp.allclose(loss, ref, atol=1e-5, rtol=1e-5), (loss, ref)

    loss_s = jax.block_until_ready(
        label_smoothing_cross_entropy(logits, target, eps=0.1, reduction="sum"))
    ref_s = _reference(logits, target, eps=0.1, reduction="sum")
    assert jnp.allclose(loss_s, ref_s, atol=1e-4, rtol=1e-5), (loss_s, ref_s)

    # Row tiling + last-partial-tile masking + bf16 (native-dtype / MXU) path.
    N2, C2 = 20, 32
    logits2 = jax.random.normal(k3, (N2, C2), dtype=jnp.bfloat16)
    target2 = jax.random.randint(k4, (N2,), 0, C2, dtype=jnp.int32)
    loss2 = jax.block_until_ready(
        label_smoothing_cross_entropy(logits2, target2, eps=0.1,
                                      reduction="mean", row_tile=8))
    ref2 = _reference(logits2, target2, eps=0.1)
    assert jnp.allclose(loss2, ref2, atol=1e-3, rtol=1e-3), (loss2, ref2)

    # Auto-tiling path with a multi-step (even) grid.
    N3, C3 = 192, 256
    logits3 = jax.random.normal(k5, (N3, C3), dtype=jnp.float32)
    target3 = jax.random.randint(k6, (N3,), 0, C3, dtype=jnp.int32)
    loss3 = jax.block_until_ready(
        label_smoothing_cross_entropy(logits3, target3, eps=0.1, reduction="mean"))
    ref3 = _reference(logits3, target3, eps=0.1)
    assert jnp.allclose(loss3, ref3, atol=1e-4, rtol=1e-4), (loss3, ref3)

    print("KERNEL_OK")
</pallas_src>

<mosaic_0001>
module attributes {stable_mosaic.version = 11 : i64} {
  func.func @_label_smoothing_ce_kernel(%arg0: i32, %arg1: memref<8x32xf32, #tpu.memory_space<vmem>>, %arg2: memref<8x1xi32, #tpu.memory_space<vmem>>, %arg3: memref<1x8x128xf32, #tpu.memory_space<vmem>>) attributes {dimension_semantics = [#tpu.dimension_semantics<parallel>], iteration_bounds = array<i64: 1>, scalar_prefetch = 0 : i64, scratch_operands = 0 : i64, tpu.core_type = #tpu.core_type<tc>, window_params = [{transform_indices = @transform_0, window_bounds = array<i64: 8, 32>}, {transform_indices = @transform_1, window_bounds = array<i64: 8, 1>}, {transform_indices = @transform_2, window_bounds = array<i64: 1, 8, 128>}]} {
    %c0 = arith.constant 0 : index
    %c0_0 = arith.constant 0 : index
    %0 = vector.load %arg1[%c0, %c0_0] : memref<8x32xf32, #tpu.memory_space<vmem>>, vector<8x32xf32>
    %cst = arith.constant dense<0xFF800000> : vector<8xf32>
    %1 = vector.multi_reduction <maximumf>, %0, %cst [1] : vector<8x32xf32> to vector<8xf32>
    %2 = vector.shape_cast %1 : vector<8xf32> to vector<8x1xf32>
    %3 = vector.broadcast %2 : vector<8x1xf32> to vector<8x32xf32>
    %4 = arith.subf %0, %3 : vector<8x32xf32>
    %5 = math.exp %4 : vector<8x32xf32>
    %cst_1 = arith.constant dense<0.000000e+00> : vector<8xf32>
    %6 = vector.multi_reduction <add>, %5, %cst_1 [1] : vector<8x32xf32> to vector<8xf32>
    %7 = vector.shape_cast %6 : vector<8xf32> to vector<8x1xf32>
    %8 = math.log %7 : vector<8x1xf32>
    %9 = arith.addf %8, %2 : vector<8x1xf32>
    %c0_2 = arith.constant 0 : index
    %c0_3 = arith.constant 0 : index
    %10 = vector.load %arg2[%c0_2, %c0_3] : memref<8x1xi32, #tpu.memory_space<vmem>>, vector<8x1xi32>
    %11 = tpu.iota {dimensions = array<i32: 1>} : vector<8x32xi32>
    %12 = vector.broadcast %10 : vector<8x1xi32> to vector<8x32xi32>
    %13 = arith.cmpi eq, %11, %12 : vector<8x32xi32>
    %cst_4 = arith.constant 0.000000e+00 : f32
    %14 = vector.broadcast %cst_4 : f32 to vector<8x32xf32>
    %15 = arith.select %13, %0, %14 : vector<8x32xi1>, vector<8x32xf32>
    %cst_5 = arith.constant 1.000000e+00 : f32
    %16 = vector.broadcast %cst_5 : f32 to vector<32x128xf32>
    %cst_6 = arith.constant dense<0.000000e+00> : vector<8x128xf32>
    %17 = tpu.matmul %0, %16, %cst_6 {dimension_numbers = #tpu.dot_dimension_numbers<[1], [0], [0], [1], [0, 0, 1, 1], [], []>} : vector<8x32xf32>, vector<32x128xf32>, vector<8x128xf32> -> vector<8x128xf32>
    %18 = vector.extract_strided_slice %17 {offsets = [0, 0], sizes = [8, 1], strides = [1, 1]} : vector<8x128xf32> to vector<8x1xf32>
    %cst_7 = arith.constant dense<0.000000e+00> : vector<8x128xf32>
    %19 = tpu.matmul %15, %16, %cst_7 {dimension_numbers = #tpu.dot_dimension_numbers<[1], [0], [0], [1], [0, 0, 1, 1], [], []>} : vector<8x32xf32>, vector<32x128xf32>, vector<8x128xf32> -> vector<8x128xf32>
    %20 = vector.extract_strided_slice %19 {offsets = [0, 0], sizes = [8, 1], strides = [1, 1]} : vector<8x128xf32> to vector<8x1xf32>
    %cst_8 = arith.constant 3.200000e+01 : f32
    %21 = vector.broadcast %cst_8 : f32 to vector<8x1xf32>
    %22 = arith.mulf %21, %9 : vector<8x1xf32>
    %23 = arith.subf %22, %18 : vector<8x1xf32>
    %24 = arith.subf %9, %20 : vector<8x1xf32>
    %c8_i32 = arith.constant 8 : i32
    %25 = arith.muli %arg0, %c8_i32 : i32
    %26 = tpu.iota {dimensions = array<i32: 0>} : vector<8x1xi32>
    %27 = vector.broadcast %25 : i32 to vector<8x1xi32>
    %28 = arith.addi %27, %26 : vector<8x1xi32>
    %c8_i32_9 = arith.constant 8 : i32
    %29 = vector.broadcast %c8_i32_9 : i32 to vector<8x1xi32>
    %30 = arith.cmpi slt, %28, %29 : vector<8x1xi32>
    %cst_10 = arith.constant 0.000000e+00 : f32
    %31 = vector.broadcast %cst_10 : f32 to vector<8x1xf32>
    %32 = arith.select %30, %23, %31 : vector<8x1xi1>, vector<8x1xf32>
    %33 = vector.shape_cast %32 : vector<8x1xf32> to vector<1x8x1xf32>
    %cst_11 = arith.constant dense<0.000000e+00> : vector<1xf32>
    %34 = vector.multi_reduction <add>, %33, %cst_11 [1, 2] : vector<1x8x1xf32> to vector<1xf32>
    %35 = vector.shape_cast %34 : vector<1xf32> to vector<1x1x1xf32>
    %36 = vector.extract %35[0, 0, 0] : f32 from vector<1x1x1xf32>
    %cst_12 = arith.constant 0.000000e+00 : f32
    %37 = vector.broadcast %cst_12 : f32 to vector<8x1xf32>
    %38 = arith.select %30, %24, %37 : vector<8x1xi1>, vector<8x1xf32>
    %39 = vector.shape_cast %38 : vector<8x1xf32> to vector<1x8x1xf32>
    %cst_13 = arith.constant dense<0.000000e+00> : vector<1xf32>
    %40 = vector.multi_reduction <add>, %39, %cst_13 [1, 2] : vector<1x8x1xf32> to vector<1xf32>
    %41 = vector.shape_cast %40 : vector<1xf32> to vector<1x1x1xf32>
    %42 = vector.extract %41[0, 0, 0] : f32 from vector<1x1x1xf32>
    %cst_14 = arith.constant 3.125000e-03 : f32
    %43 = arith.mulf %36, %cst_14 : f32
    %cst_15 = arith.constant 0.899999976 : f32
    %44 = arith.mulf %cst_15, %42 : f32
    %45 = arith.addf %43, %44 : f32
    %46 = tpu.iota {dimensions = array<i32: 1>} : vector<1x8x128xi32>
    %47 = tpu.iota {dimensions = array<i32: 2>} : vector<1x8x128xi32>
    %c0_i32 = arith.constant 0 : i32
    %48 = vector.broadcast %c0_i32 : i32 to vector<1x8x128xi32>
    %49 = arith.cmpi eq, %46, %48 : vector<1x8x128xi32>
    %c0_i32_16 = arith.constant 0 : i32
    %50 = vector.broadcast %c0_i32_16 : i32 to vector<1x8x128xi32>
    %51 = arith.cmpi eq, %47, %50 : vector<1x8x128xi32>
    %52 = arith.andi %49, %51 : vector<1x8x128xi1>
    %cst_17 = arith.constant 0.000000e+00 : f32
    %53 = vector.broadcast %45 : f32 to vector<1x8x128xf32>
    %54 = vector.broadcast %cst_17 : f32 to vector<1x8x128xf32>
    %55 = arith.select %52, %53, %54 : vector<1x8x128xi1>, vector<1x8x128xf32>
    %c0_18 = arith.constant 0 : index
    %c0_19 = arith.constant 0 : index
    %c0_20 = arith.constant 0 : index
    %56 = vector.load %arg3[%c0_18, %c0_19, %c0_20] : memref<1x8x128xf32, #tpu.memory_space<vmem>>, vector<1x8x128xf32>
    tpu.vector_store %arg3[%c0_18, %c0_19, %c0_20], %55 {strides = array<i32>} : memref<1x8x128xf32, #tpu.memory_space<vmem>>, vector<1x8x128xf32>,
    return
  }
  func.func @transform_0(%arg0: i32) -> (i32, i32) {
    %c0_i32 = arith.constant 0 : i32
    %c0_i32_0 = arith.constant 0 : i32
    return %arg0, %c0_i32 : i32, i32
  }
  func.func @transform_1(%arg0: i32) -> (i32, i32) {
    %c0_i32 = arith.constant 0 : i32
    %c0_i32_0 = arith.constant 0 : i32
    return %arg0, %c0_i32 : i32, i32
  }
  func.func @transform_2(%arg0: i32) -> (i32, i32, i32) {
    %c0_i32 = arith.constant 0 : i32
    %c0_i32_0 = arith.constant 0 : i32
    %c0_i32_1 = arith.constant 0 : i32
    return %arg0, %c0_i32, %c0_i32_0 : i32, i32, i32
  }
}

</mosaic_0001>

<llo_original>
// kernel: tpu_custom_call.1
$region0: #{tpu_custom_call.1}
  #allocation0 [shape = 'u32[]', space=smem, size = 0x4, offset = 0x4, fixed_abs, tag = 'smem constant byte address 0x4 - core index']
  #allocation1 [shape = 'u32[72,128]{1,0:T(1,128)}', space=vmem, size = 0x9000, scoped, tag = 'internal scratch']
  %s0 = inlined_call_operand.vmem [shape: f32[8,32], index: 0, kind: input, shape index: {}]
  %s1 = inlined_call_operand.vmem [shape: s32[8,1], index: 1, kind: input, shape index: {}]
  %s2 = inlined_call_operand.hbm [shape: f32[1,8,128], index: 2, kind: output, shape index: {}]
  %s3 = sld [smem:[#allocation0]]
  $region18: #{tpu_custom_call.1} parent=0
    _
  %s5 = ssub.s32 1, %s3
  %s6 = scalar_select 0, %s5, %s3
  $region1: #{tpu_custom_call.1} parent=0
    #allocation2 [shape = 'u8[4096]{0}', space=vmem, size = 0x1000, scoped, tag = 'output window, operand 0, single buffered']
    #allocation3 [shape = 's32[1]{0}', space=sflag, size = 0x4, scoped, tag = 'scoped memory for tpu_custom_call.1']
    %7 = vsyncpa [#allocation3], 0
    // Predicated region
    $region2: #{tpu_custom_call.1} parent=1 // pred_check
      _
    $region3: #{tpu_custom_call.1} parent=1 // pred_check_branch
      %9 = sbr.rel (0) target = $region5
    $region4: #{tpu_custom_call.1} parent=1 // pred_region
      _
    $region5: #{tpu_custom_call.1} parent=1 // pred_fallthru
      _
    // Predicated region
    $region6: #{tpu_custom_call.1} parent=1 // pred_check
      _
    $region7: #{tpu_custom_call.1} parent=1 // pred_check_branch
      %11 = sbr.rel (0) target = $region9
    $region8: #{tpu_custom_call.1} parent=1 // pred_region
      _
    $region9: #{tpu_custom_call.1} parent=1 // pred_fallthru
      _
    %v12 = vld [vmem:[%s0] sm:$0xff]
    %vm13 = vcmask 261120
    %v14 = vsel %vm13, %v12, -inf
    %15 = vmax.xlane.f32.xlu0 %v14
    %v16 = vpop.xlane.xlu0 %15
    %v17 = vsub.f32 %v12, %v16
    %v18 = vmul.f32 %v17, 1.442695
    %v19 = vpow.pop %v18
    %v20 = vsel %vm13, %v19, 0.0
    %21 = vadd.xlane.f32.xlu0 %v20
    %v22 = vpop.xlane.xlu0 %21
    %v23 = vlog2.pop %v22
    %v24 = vmul.f32 %v23, 0.6931472
    %v25 = vadd.f32 %v24, %v16
    %v26 = vld [vmem:[%s1] sm:$0xff]
    %v27 = vlaneseq
    %v28 = vand.u32 %v27, 127
    %29 = vset.pattern.permute.xlu0 0
    %30 = vperm.xlu0 %29, %v26
    %v31 = vpop.permute.xlu0 %30
    %vm32 = vcmp.eq.s32.totalorder %v28, %v31
    %v33 = vsel %vm32, %v12, 0.0
    %v35 = vsel %vm13, %v12, 0
    %37 = vmatpush.msra.mxu0 0.0
    %38 = vmatpush.msra.mxu0 0.0
    %39 = vmatpush.msra.mxu0 0.0
    %40 = vmatpush.msra.mxu0 0.0
    %41 = vmatpush.msra.mxu0 0.0
    %42 = vmatpush.msra.mxu0 0.0
    %43 = vmatpush.msra.mxu0 0.0
    %44 = vmatpush.msra.mxu0 0.0
    %45 = vmatpush.msra.mxu0 0.0
    %46 = vmatpush.msra.mxu0 0.0
    %47 = vmatpush.msra.mxu0 0.0
    %48 = vmatpush.msra.mxu0 0.0
    %49 = vmatpush.msra.mxu0 1.0
    %50 = vmatpush.msra.mxu0 1.0
    %51 = vmatpush.msra.mxu0 1.0
    %52 = vmatpush.msra.mxu0 1.0
    %53 = vmatmul.f32.gmra.mxu0 %v35
    %v54 = vpop.f32.mrf.mxu0
    %v55 = vadd.f32 0.0, %v54
    %56 = vdwg.mxu0
    %v58 = vsel %vm13, %v33, 0
    %60 = vmatpush.msra.mxu0 0.0
    %61 = vmatpush.msra.mxu0 0.0
    %62 = vmatpush.msra.mxu0 0.0
    %63 = vmatpush.msra.mxu0 0.0
    %64 = vmatpush.msra.mxu0 0.0
    %65 = vmatpush.msra.mxu0 0.0
    %66 = vmatpush.msra.mxu0 0.0
    %67 = vmatpush.msra.mxu0 0.0
    %68 = vmatpush.msra.mxu0 0.0
    %69 = vmatpush.msra.mxu0 0.0
    %70 = vmatpush.msra.mxu0 0.0
    %71 = vmatpush.msra.mxu0 0.0
    %72 = vmatpush.msra.mxu0 1.0
    %73 = vmatpush.msra.mxu0 1.0
    %74 = vmatpush.msra.mxu0 1.0
    %75 = vmatpush.msra.mxu0 1.0
    %76 = vmatmul.f32.gmra.mxu0 %v58
    %v77 = vpop.f32.mrf.mxu0
    %v78 = vadd.f32 0.0, %v77
    %79 = vdwg.mxu0
    %v80 = vmul.f32 %v25, 32.0
    %v81 = vsub.f32 %v80, %v55
    %v82 = vsub.f32 %v25, %v78
    %s83 = smul.u32 0, 8
    %v84 = vlaneseq
    %v85 = vshrl.u32 %v84, 7
    %v86 = vstv %s83
    %v87 = vadd.s32 %v86, %v85
    %vm88 = vcmp.lt.s32.totalorder %v87, 8
    %v89 = vsel %vm88, %v81, 0.0
    %vm90 = vcmask 7168
    %v91 = vsel %vm90, %v89, 0.0
    %92 = vadd.xlane.f32.xlu0 %v91
    %v93 = vpop.xlane.xlu0 %92
    %v94 = vrot.slane %v93, 4
    %v95 = vadd.f32 %v93, %v94
    %v96 = vrot.slane %v95, 2
    %v97 = vadd.f32 %v95, %v96
    %v98 = vrot.slane %v97, 1
    %v99 = vadd.f32 %v97, %v98
    %s100 = vtos %v99
    %v101 = vsel %vm88, %v82, 0.0
    %v102 = vsel %vm90, %v101, 0.0
    %103 = vadd.xlane.f32.xlu0 %v102
    %v104 = vpop.xlane.xlu0 %103
    %v105 = vrot.slane %v104, 4
    %v106 = vadd.f32 %v104, %v105
    %v107 = vrot.slane %v106, 2
    %v108 = vadd.f32 %v106, %v107
    %v109 = vrot.slane %v108, 1
    %v110 = vadd.f32 %v108, %v109
    %s111 = vtos %v110
    %s112 = smul.f32 %s100, 0.003125
    %s113 = smul.f32 %s111, 0.9
    %s114 = sadd.f32 %s112, %s113
    %vm115 = vcmp.eq.s32.totalorder %v85, 0
    %vm116 = vcmp.eq.s32.totalorder %v28, 0
    %vm117 = vmand %vm115, %vm116
    %v118 = vstv %s114
    %v119 = vsel %vm117, %v118, 0.0
    %120 = vst [vmem:[#allocation2] sm:$0xff] %v119
    // Predicated region
    $region10: #{tpu_custom_call.1} parent=1 // pred_check
      _
    $region11: #{tpu_custom_call.1} parent=1 // pred_check_branch
      %122 = sbr.rel (0) target = $region13
    $region12: #{tpu_custom_call.1} parent=1 // pred_region
      %124 = vsyncadd [#allocation3], 0
      %s126 = sshll.u32 [#allocation2], 4
      %s127 = int_to_ptr.vmem [resolvable:$true] %s126
      %s128 = sshll.u32 %s2, 4
      %s129 = int_to_ptr.hbm [resolvable:$true] %s128
      %131 = dma.vmem_to_hbm [thread:$0]  %s127, 128, %s129, [#allocation3]
    $region13: #{tpu_custom_call.1} parent=1 // pred_fallthru
      _
    // Predicated region
    $region14: #{tpu_custom_call.1} parent=1 // pred_check
      _
    $region15: #{tpu_custom_call.1} parent=1 // pred_check_branch
      %133 = sbr.rel (0) target = $region17
    $region16: #{tpu_custom_call.1} parent=1 // pred_region
      %135 = dma.done [#allocation3], 128
    $region17: #{tpu_custom_call.1} parent=1 // pred_fallthru
      _
    %136 = vsyncpa [#allocation3], 1

</llo_original>
